<compile_context>
chip_gen: v7x
topology: tpu7x:2x2x1
jax: 0.10.0
libtpu: 0.0.40
codegen_flags: <defaults>
</compile_context>

<pallas_src>
import jax
import jax.numpy as jnp
from jax.experimental import pallas as pl
from jax.experimental.pallas import tpu as pltpu


def semantic_attention_kernel(z_ref, w1bd_ref, b1t_ref, w2bd_ref, e_ref, f_ref,
                              out_ref):
    # z_ref: (tile_n, M*D) lane-dense packed semantic embeddings.
    z_p = z_ref[...].astype(jnp.float32)

    # Per-metapath projection for all metapaths in one lane-dense MXU matmul:
    # h[n, m*H + k] = tanh( sum_d z[n, m, d] * W1[d, k] + b1[k] )
    h = jnp.tanh(
        jnp.dot(z_p, w1bd_ref[...], preferred_element_type=jnp.float32)
        + b1t_ref[...]
    )                                                       # (tile_n, M*H)

    # logits[n, m] = sum_k h[n, m*H + k] * w2[k]    (b2 dropped: softmax shift-invariant)
    logits = jnp.dot(h, w2bd_ref[...], preferred_element_type=jnp.float32)  # (tile_n, M)

    # Softmax over the metapath axis (dim=1 of the original (N, M, D) tensor).
    m = jnp.max(logits, axis=-1, keepdims=True)
    e = jnp.exp(logits - m)
    denom = jnp.sum(e, axis=-1, keepdims=True)
    inv = pl.reciprocal(denom, approx=True)                 # EUP slot
    inv = inv * (2.0 - denom * inv)                         # one Newton step -> ~f32 exact
    beta = e * inv                                          # (tile_n, M)

    # Broadcast beta over each metapath's D lanes (lane-dense MXU matmul with a
    # 0/1 expansion matrix), weight z, then fold the M lane-blocks down to D
    # with a 0/1 fold matrix. No in-kernel reshapes anywhere.
    beta_exp = jnp.dot(beta, e_ref[...], preferred_element_type=jnp.float32)  # (tile_n, M*D)
    weighted = beta_exp * z_p                                                 # VPU
    out = jnp.dot(weighted, f_ref[...], preferred_element_type=jnp.float32)   # (tile_n, D)

    out_ref[...] = out.astype(out_ref.dtype)


def semantic_attention(z, w1, b1, w2, b2, *, tile_n=1024):
    """z: (N, M, D); w1: (D, H); b1: (1, H) or (H,); w2: (H, 1) or (H,); b2 ignored."""
    del b2  # softmax over the metapath axis is shift-invariant -> b2 is inert.
    N, M, D = z.shape
    H = w1.shape[1]
    MD, MH = M * D, M * H

    # ---- lane-dense packing of z (free row-major reshape) ----
    z_p = z.reshape(N, MD)

    # ---- small constant weight matrices built once in the wrapper ----
    w1f = w1.astype(jnp.float32)
    w2f = w2.reshape(H).astype(jnp.float32)
    eye_m = jnp.eye(M, dtype=jnp.float32)
    # block-diagonal W1:  (M*D, M*H), block m = W1
    w1_bd = jnp.einsum("ab,dh->adbh", eye_m, w1f).reshape(MD, MH)
    # tiled bias:         (1, M*H)
    b1_t = jnp.tile(b1.reshape(1, H).astype(jnp.float32), (1, M))
    # block w2 columns:   (M*H, M), column m holds w2 in rows m*H:(m+1)*H
    w2_bd = jnp.einsum("ab,h->ahb", eye_m, w2f).reshape(MH, M)
    # beta expansion:     (M, M*D), row m has ones in lanes m*D:(m+1)*D
    e_mat = jnp.einsum("ab,d->abd", eye_m, jnp.ones((D,), jnp.float32)).reshape(M, MD)
    # lane-block fold:    (M*D, D), stacked identities
    f_mat = jnp.tile(jnp.eye(D, dtype=jnp.float32), (M, 1))

    # ---- node tiling: big tiles, multiple of 8 sublanes, pad N (no divisibility assert) ----
    tile_n = max(8, min(int(tile_n), pl.cdiv(N, 8) * 8))
    tile_n = (tile_n // 8) * 8
    grid_n = pl.cdiv(N, tile_n)
    n_pad = grid_n * tile_n
    if n_pad != N:
        z_p = jnp.pad(z_p, ((0, n_pad - N), (0, 0)))

    out = pl.pallas_call(
        semantic_attention_kernel,
        out_shape=jax.ShapeDtypeStruct((n_pad, D), z.dtype),
        grid_spec=pltpu.PrefetchScalarGridSpec(
            num_scalar_prefetch=0,
            grid=(grid_n,),
            in_specs=[
                pl.BlockSpec((tile_n, MD), lambda i: (i, 0)),  # packed z tile
                pl.BlockSpec((MD, MH), lambda i: (0, 0)),      # block-diag W1
                pl.BlockSpec((1, MH), lambda i: (0, 0)),       # tiled b1
                pl.BlockSpec((MH, M), lambda i: (0, 0)),       # block w2
                pl.BlockSpec((M, MD), lambda i: (0, 0)),       # beta expansion
                pl.BlockSpec((MD, D), lambda i: (0, 0)),       # lane-block fold
            ],
            out_specs=pl.BlockSpec((tile_n, D), lambda i: (i, 0)),
        ),
        compiler_params=pltpu.CompilerParams(
            dimension_semantics=("parallel",),          # megacore-shardable on v7x
            vmem_limit_bytes=32 * 1024 * 1024,          # fits v5e / v6e / v7x scoped VMEM
        ),
    )(z_p, w1_bd, b1_t, w2_bd, e_mat, f_mat)

    return out[:N]


def semantic_attention_ref(z, w1, b1, w2, b2):
    w = jnp.tanh(z @ w1 + b1.reshape(-1)) @ w2 + b2.reshape(())
    beta = jax.nn.softmax(w, axis=1)
    return (beta * z).sum(axis=1)


if __name__ == "__main__":
    # Small shapes consistent with the module: N nodes, M metapaths, in_size D, hidden H.
    N, M, D, H = 64, 4, 32, 32

    key = jax.random.PRNGKey(0)
    kz, kw1, kb1, kw2, kb2 = jax.random.split(key, 5)

    z = jax.random.normal(kz, (N, M, D), dtype=jnp.float32)

    # Deterministic PyTorch-Linear-like init (uniform with bound 1/sqrt(fan_in)).
    bound1 = 1.0 / (D ** 0.5)
    bound2 = 1.0 / (H ** 0.5)
    w1 = jax.random.uniform(kw1, (D, H), jnp.float32, -bound1, bound1)
    b1 = jax.random.uniform(kb1, (1, H), jnp.float32, -bound1, bound1)
    w2 = jax.random.uniform(kw2, (H, 1), jnp.float32, -bound2, bound2)
    b2 = jax.random.uniform(kb2, (1, 1), jnp.float32, -bound2, bound2)

    # tile_n=32 here just to exercise a multi-step grid at this small N;
    # production default is tile_n=1024.
    out = semantic_attention(z, w1, b1, w2, b2, tile_n=32)
    out = jax.block_until_ready(out)

    ref = semantic_attention_ref(z, w1, b1, w2, b2)
    assert out.shape == (N, D)
    assert jnp.allclose(out, ref, atol=1e-4, rtol=1e-4), "mismatch vs reference"

    print("KERNEL_OK")
</pallas_src>

<mosaic_0001>
module attributes {stable_mosaic.version = 11 : i64} {
  func.func @semantic_attention_kernel(%arg0: i32, %arg1: memref<32x128xf32, #tpu.memory_space<vmem>>, %arg2: memref<128x128xf32, #tpu.memory_space<vmem>>, %arg3: memref<1x128xf32, #tpu.memory_space<vmem>>, %arg4: memref<128x4xf32, #tpu.memory_space<vmem>>, %arg5: memref<4x128xf32, #tpu.memory_space<vmem>>, %arg6: memref<128x32xf32, #tpu.memory_space<vmem>>, %arg7: memref<32x32xf32, #tpu.memory_space<vmem>>) attributes {dimension_semantics = [#tpu.dimension_semantics<parallel>], iteration_bounds = array<i64: 2>, scalar_prefetch = 0 : i64, scratch_operands = 0 : i64, tpu.core_type = #tpu.core_type<tc>, window_params = [{transform_indices = @transform_0, window_bounds = array<i64: 32, 128>}, {pipeline_mode = #tpu.pipeline_mode<synchronous>, transform_indices = @transform_1, window_bounds = array<i64: 128, 128>}, {pipeline_mode = #tpu.pipeline_mode<synchronous>, transform_indices = @transform_2, window_bounds = array<i64: 1, 128>}, {pipeline_mode = #tpu.pipeline_mode<synchronous>, transform_indices = @transform_3, window_bounds = array<i64: 128, 4>}, {pipeline_mode = #tpu.pipeline_mode<synchronous>, transform_indices = @transform_4, window_bounds = array<i64: 4, 128>}, {pipeline_mode = #tpu.pipeline_mode<synchronous>, transform_indices = @transform_5, window_bounds = array<i64: 128, 32>}, {transform_indices = @transform_6, window_bounds = array<i64: 32, 32>}]} {
    %c0 = arith.constant 0 : index
    %c0_0 = arith.constant 0 : index
    %0 = vector.load %arg1[%c0, %c0_0] : memref<32x128xf32, #tpu.memory_space<vmem>>, vector<32x128xf32>
    %c0_1 = arith.constant 0 : index
    %c0_2 = arith.constant 0 : index
    %1 = vector.load %arg2[%c0_1, %c0_2] : memref<128x128xf32, #tpu.memory_space<vmem>>, vector<128x128xf32>
    %cst = arith.constant dense<0.000000e+00> : vector<32x128xf32>
    %2 = tpu.matmul %0, %1, %cst {dimension_numbers = #tpu.dot_dimension_numbers<[1], [0], [0], [1], [0, 0, 1, 1], [], []>} : vector<32x128xf32>, vector<128x128xf32>, vector<32x128xf32> -> vector<32x128xf32>
    %c0_3 = arith.constant 0 : index
    %c0_4 = arith.constant 0 : index
    %3 = vector.load %arg3[%c0_3, %c0_4] : memref<1x128xf32, #tpu.memory_space<vmem>>, vector<1x128xf32>
    %4 = vector.broadcast %3 : vector<1x128xf32> to vector<32x128xf32>
    %5 = arith.addf %2, %4 : vector<32x128xf32>
    %6 = math.tanh %5 : vector<32x128xf32>
    %c0_5 = arith.constant 0 : index
    %c0_6 = arith.constant 0 : index
    %7 = vector.load %arg4[%c0_5, %c0_6] : memref<128x4xf32, #tpu.memory_space<vmem>>, vector<128x4xf32>
    %cst_7 = arith.constant dense<0.000000e+00> : vector<32x4xf32>
    %8 = tpu.matmul %6, %7, %cst_7 {dimension_numbers = #tpu.dot_dimension_numbers<[1], [0], [0], [1], [0, 0, 1, 1], [], []>} : vector<32x128xf32>, vector<128x4xf32>, vector<32x4xf32> -> vector<32x4xf32>
    %cst_8 = arith.constant dense<0xFF800000> : vector<32xf32>
    %9 = vector.multi_reduction <maximumf>, %8, %cst_8 [1] : vector<32x4xf32> to vector<32xf32>
    %10 = vector.shape_cast %9 : vector<32xf32> to vector<32x1xf32>
    %11 = vector.broadcast %10 : vector<32x1xf32> to vector<32x4xf32>
    %12 = arith.subf %8, %11 : vector<32x4xf32>
    %13 = math.exp %12 : vector<32x4xf32>
    %cst_9 = arith.constant dense<0.000000e+00> : vector<32xf32>
    %14 = vector.multi_reduction <add>, %13, %cst_9 [1] : vector<32x4xf32> to vector<32xf32>
    %15 = vector.shape_cast %14 : vector<32xf32> to vector<32x1xf32>
    %16 = tpu.reciprocal %15 {approx = true} : vector<32x1xf32> -> vector<32x1xf32>
    %17 = arith.mulf %15, %16 : vector<32x1xf32>
    %cst_10 = arith.constant 2.000000e+00 : f32
    %18 = vector.broadcast %cst_10 : f32 to vector<32x1xf32>
    %19 = arith.subf %18, %17 : vector<32x1xf32>
    %20 = arith.mulf %16, %19 : vector<32x1xf32>
    %21 = vector.broadcast %20 : vector<32x1xf32> to vector<32x4xf32>
    %22 = arith.mulf %13, %21 : vector<32x4xf32>
    %c0_11 = arith.constant 0 : index
    %c0_12 = arith.constant 0 : index
    %23 = vector.load %arg5[%c0_11, %c0_12] : memref<4x128xf32, #tpu.memory_space<vmem>>, vector<4x128xf32>
    %cst_13 = arith.constant dense<0.000000e+00> : vector<32x128xf32>
    %24 = tpu.matmul %22, %23, %cst_13 {dimension_numbers = #tpu.dot_dimension_numbers<[1], [0], [0], [1], [0, 0, 1, 1], [], []>} : vector<32x4xf32>, vector<4x128xf32>, vector<32x128xf32> -> vector<32x128xf32>
    %25 = arith.mulf %24, %0 : vector<32x128xf32>
    %c0_14 = arith.constant 0 : index
    %c0_15 = arith.constant 0 : index
    %26 = vector.load %arg6[%c0_14, %c0_15] : memref<128x32xf32, #tpu.memory_space<vmem>>, vector<128x32xf32>
    %cst_16 = arith.constant dense<0.000000e+00> : vector<32x32xf32>
    %27 = tpu.matmul %25, %26, %cst_16 {dimension_numbers = #tpu.dot_dimension_numbers<[1], [0], [0], [1], [0, 0, 1, 1], [], []>} : vector<32x128xf32>, vector<128x32xf32>, vector<32x32xf32> -> vector<32x32xf32>
    %c0_17 = arith.constant 0 : index
    %c0_18 = arith.constant 0 : index
    %28 = vector.load %arg7[%c0_17, %c0_18] : memref<32x32xf32, #tpu.memory_space<vmem>>, vector<32x32xf32>
    tpu.vector_store %arg7[%c0_17, %c0_18], %27 {strides = array<i32>} : memref<32x32xf32, #tpu.memory_space<vmem>>, vector<32x32xf32>,
    return
  }
  func.func @transform_0(%arg0: i32) -> (i32, i32) {
    %c0_i32 = arith.constant 0 : i32
    %c0_i32_0 = arith.constant 0 : i32
    return %arg0, %c0_i32 : i32, i32
  }
  func.func @transform_1(%arg0: i32) -> (i32, i32) {
    %c0_i32 = arith.constant 0 : i32
    %c0_i32_0 = arith.constant 0 : i32
    %c0_i32_1 = arith.constant 0 : i32
    return %c0_i32, %c0_i32_0 : i32, i32
  }
  func.func @transform_2(%arg0: i32) -> (i32, i32) {
    %c0_i32 = arith.constant 0 : i32
    %c0_i32_0 = arith.constant 0 : i32
    %c0_i32_1 = arith.constant 0 : i32
    return %c0_i32, %c0_i32_0 : i32, i32
  }
  func.func @transform_3(%arg0: i32) -> (i32, i32) {
    %c0_i32 = arith.constant 0 : i32
    %c0_i32_0 = arith.constant 0 : i32
    %c0_i32_1 = arith.constant 0 : i32
    return %c0_i32, %c0_i32_0 : i32, i32
  }
  func.func @transform_4(%arg0: i32) -> (i32, i32) {
    %c0_i32 = arith.constant 0 : i32
    %c0_i32_0 = arith.constant 0 : i32
    %c0_i32_1 = arith.constant 0 : i32
    return %c0_i32, %c0_i32_0 : i32, i32
  }
  func.func @transform_5(%arg0: i32) -> (i32, i32) {
    %c0_i32 = arith.constant 0 : i32
    %c0_i32_0 = arith.constant 0 : i32
    %c0_i32_1 = arith.constant 0 : i32
    return %c0_i32, %c0_i32_0 : i32, i32
  }
  func.func @transform_6(%arg0: i32) -> (i32, i32) {
    %c0_i32 = arith.constant 0 : i32
    %c0_i32_0 = arith.constant 0 : i32
    return %arg0, %c0_i32 : i32, i32
  }
}

</mosaic_0001>

<llo_original>
// kernel: tpu_custom_call.1
$region0: #{tpu_custom_call.1}
  #allocation0 [shape = 'u32[]', space=smem, size = 0x4, offset = 0x4, fixed_abs, tag = 'smem constant byte address 0x4 - core index']
  #allocation1 [shape = 'u32[144,128]{1,0:T(1,128)}', space=vmem, size = 0x12000, scoped, tag = 'internal scratch']
  %s0 = inlined_call_operand.vmem [shape: f32[64,128], index: 0, kind: input, shape index: {}]
  %s1 = inlined_call_operand.vmem [shape: f32[128,128], index: 1, kind: input, shape index: {}]
  %s2 = inlined_call_operand.vmem [shape: f32[1,128], index: 2, kind: input, shape index: {}]
  %s3 = inlined_call_operand.vmem [shape: f32[128,4], index: 3, kind: input, shape index: {}]
  %s4 = inlined_call_operand.vmem [shape: f32[4,128], index: 4, kind: input, shape index: {}]
  %s5 = inlined_call_operand.vmem [shape: f32[128,32], index: 5, kind: input, shape index: {}]
  %s6 = inlined_call_operand.vmem [shape: f32[64,32], index: 6, kind: output, shape index: {}]
  %s7 = sld [smem:[#allocation0]]
  $region57: #{tpu_custom_call.1} parent=0
    _
  %s9 = ssub.s32 1, %s7
  %s10 = scalar_select 0, %s9, %s7
  loop: start=0, step=1, limit=4
  $region2: #{tpu_custom_call.1} parent=0 // loop_pre_header
    _
  $region3: #{tpu_custom_call.1} parent=0 // loop_header
    %s12 = sphi 0, %s16
    %p13 = scmp.ge.s32.totalorder %s12, 4
    %s22 = sphi 0, %s24
    %s25 = sphi 0, %s22
    %s26 = sphi 0, %s25
    %s42 = sphi 0, %s26
    %s46 = sphi 0, %s46
    %s48 = sphi 0, %s46
    %s49 = sphi 0, %s48
    %s63 = sphi 0, %s49
    %s67 = sphi 0, %s67
    %s69 = sphi 0, %s67
    %s70 = sphi 0, %s69
    %s84 = sphi 0, %s70
    %s88 = sphi 0, %s88
    %s90 = sphi 0, %s88
    %s91 = sphi 0, %s90
    %s105 = sphi 0, %s91
    %s109 = sphi 0, %s109
    %s111 = sphi 0, %s109
    %s112 = sphi 0, %s111
    %s126 = sphi 0, %s112
    %s130 = sphi 0, %s130
    %s132 = sphi 0, %s130
    %s133 = sphi 0, %s132
    %s147 = sphi 0, %s133
    %s153 = sphi 0, %s155
    %s156 = sphi 0, %s153
    %s157 = sphi 0, %s156
    %s173 = sphi 0, %s157
  $region4: #{tpu_custom_call.1} parent=0 // loop_header_branch
    %15 = sbr.rel (%p13) target = $region8
  $region5: #{tpu_custom_call.1} parent=0 // loop_body
    %s17 = ssub.s32 %s12, 1
    %s18 = ssub.s32 %s12, 2
    %s19 = sadd.s32 %s12, 1
    %s20 = ssub.s32 %s12, %s19
    %p21 = scmp.eq.s32.totalorder %s20, 0
    %s23 = sadd.s32 %s22, 1
    %s24 = scalar_select %p21, %s22, %s23
    %p27 = pneg %p21
    %p28 = scmp.eq.s32.totalorder %s12, 1
    %p29 = por %p27, %p28
    %p30 = scmp.ne.s32.totalorder %s22, %s25
    %p31 = scmp.eq.s32.totalorder %s12, 0
    %p32 = por %p30, %p31
    %p33 = scmp.ne.s32.totalorder %s22, %s25
    %p34 = scmp.eq.s32.totalorder %s17, 1
    %p35 = por %p33, %p34
    %p36 = scmp.ne.s32.totalorder %s25, %s26
    %p37 = scmp.eq.s32.totalorder %s17, 0
    %p38 = por %p36, %p37
    %p39 = scmp.ne.s32.totalorder %s25, %s26
    %p40 = scmp.eq.s32.totalorder %s18, 1
    %p41 = por %p39, %p40
    %p43 = scmp.ne.s32.totalorder %s26, %s42
    %p44 = scmp.eq.s32.totalorder %s18, 0
    %p45 = por %p43, %p44
    %s47 = sadd.s32 %s46, 1
    %p50 = scmp.eq.s32.totalorder %s12, 1
    %p51 = scmp.ne.s32.totalorder %s46, %s48
    %p52 = scmp.eq.s32.totalorder %s12, 0
    %p53 = por %p51, %p52
    %p54 = scmp.ne.s32.totalorder %s46, %s48
    %p55 = scmp.eq.s32.totalorder %s17, 1
    %p56 = por %p54, %p55
    %p57 = scmp.ne.s32.totalorder %s48, %s49
    %p58 = scmp.eq.s32.totalorder %s17, 0
    %p59 = por %p57, %p58
    %p60 = scmp.ne.s32.totalorder %s48, %s49
    %p61 = scmp.eq.s32.totalorder %s18, 1
    %p62 = por %p60, %p61
    %p64 = scmp.ne.s32.totalorder %s49, %s63
    %p65 = scmp.eq.s32.totalorder %s18, 0
    %p66 = por %p64, %p65
    %s68 = sadd.s32 %s67, 1
    %p71 = scmp.eq.s32.totalorder %s12, 1
    %p72 = scmp.ne.s32.totalorder %s67, %s69
    %p73 = scmp.eq.s32.totalorder %s12, 0
    %p74 = por %p72, %p73
    %p75 = scmp.ne.s32.totalorder %s67, %s69
    %p76 = scmp.eq.s32.totalorder %s17, 1
    %p77 = por %p75, %p76
    %p78 = scmp.ne.s32.totalorder %s69, %s70
    %p79 = scmp.eq.s32.totalorder %s17, 0
    %p80 = por %p78, %p79
    %p81 = scmp.ne.s32.totalorder %s69, %s70
    %p82 = scmp.eq.s32.totalorder %s18, 1
    %p83 = por %p81, %p82
    %p85 = scmp.ne.s32.totalorder %s70, %s84
    %p86 = scmp.eq.s32.totalorder %s18, 0
    %p87 = por %p85, %p86
    %s89 = sadd.s32 %s88, 1
    %p92 = scmp.eq.s32.totalorder %s12, 1
    %p93 = scmp.ne.s32.totalorder %s88, %s90
    %p94 = scmp.eq.s32.totalorder %s12, 0
    %p95 = por %p93, %p94
    %p96 = scmp.ne.s32.totalorder %s88, %s90
    %p97 = scmp.eq.s32.totalorder %s17, 1
    %p98 = por %p96, %p97
    %p99 = scmp.ne.s32.totalorder %s90, %s91
    %p100 = scmp.eq.s32.totalorder %s17, 0
    %p101 = por %p99, %p100
    %p102 = scmp.ne.s32.totalorder %s90, %s91
    %p103 = scmp.eq.s32.totalorder %s18, 1
    %p104 = por %p102, %p103
    %p106 = scmp.ne.s32.totalorder %s91, %s105
    %p107 = scmp.eq.s32.totalorder %s18, 0
    %p108 = por %p106, %p107
    %s110 = sadd.s32 %s109, 1
    %p113 = scmp.eq.s32.totalorder %s12, 1
    %p114 = scmp.ne.s32.totalorder %s109, %s111
    %p115 = scmp.eq.s32.totalorder %s12, 0
    %p116 = por %p114, %p115
    %p117 = scmp.ne.s32.totalorder %s109, %s111
    %p118 = scmp.eq.s32.totalorder %s17, 1
    %p119 = por %p117, %p118
    %p120 = scmp.ne.s32.totalorder %s111, %s112
    %p121 = scmp.eq.s32.totalorder %s17, 0
    %p122 = por %p120, %p121
    %p123 = scmp.ne.s32.totalorder %s111, %s112
    %p124 = scmp.eq.s32.totalorder %s18, 1
    %p125 = por %p123, %p124
    %p127 = scmp.ne.s32.totalorder %s112, %s126
    %p128 = scmp.eq.s32.totalorder %s18, 0
    %p129 = por %p127, %p128
    %s131 = sadd.s32 %s130, 1
    %p134 = scmp.eq.s32.totalorder %s12, 1
    %p135 = scmp.ne.s32.totalorder %s130, %s132
    %p136 = scmp.eq.s32.totalorder %s12, 0
    %p137 = por %p135, %p136
    %p138 = scmp.ne.s32.totalorder %s130, %s132
    %p139 = scmp.eq.s32.totalorder %s17, 1
    %p140 = por %p138, %p139
    %p141 = scmp.ne.s32.totalorder %s132, %s133
    %p142 = scmp.eq.s32.totalorder %s17, 0
    %p143 = por %p141, %p142
    %p144 = scmp.ne.s32.totalorder %s132, %s133
    %p145 = scmp.eq.s32.totalorder %s18, 1
    %p146 = por %p144, %p145
    %p148 = scmp.ne.s32.totalorder %s133, %s147
    %p149 = scmp.eq.s32.totalorder %s18, 0
    %p150 = por %p148, %p149
    %s151 = ssub.s32 %s12, %s19
    %p152 = scmp.eq.s32.totalorder %s151, 0
    %s154 = sadd.s32 %s153, 1
    %s155 = scalar_select %p152, %s153, %s154
    %p158 = pneg %p152
    %p159 = scmp.eq.s32.totalorder %s12, 1
    %p160 = por %p158, %p159
    %p161 = scmp.ne.s32.totalorder %s153, %s156
    %p162 = scmp.eq.s32.totalorder %s12, 0
    %p163 = por %p161, %p162
    %p164 = scmp.ne.s32.totalorder %s153, %s156
    %p165 = scmp.eq.s32.totalorder %s17, 1
    %p166 = por %p164, %p165
    %p167 = scmp.ne.s32.totalorder %s156, %s157
    %p168 = scmp.eq.s32.totalorder %s17, 0
    %p169 = por %p167, %p168
    %p170 = scmp.ne.s32.totalorder %s156, %s157
    %p171 = scmp.eq.s32.totalorder %s18, 1
    %p172 = por %p170, %p171
    %p174 = scmp.ne.s32.totalorder %s157, %s173
    %p175 = scmp.eq.s32.totalorder %s18, 0
    %p176 = por %p174, %p175
    %p177 = scmp.le.s32.totalorder 1, %s12
    %p178 = scmp.lt.s32.totalorder %s12, 3
    %p179 = pnand %p177, %p178
    %p180 = pneg %p179
    // Predicated region
    $region9: #{tpu_custom_call.1} parent=5 // pred_check
      _
    $region10: #{tpu_custom_call.1} parent=5 // pred_check_branch
      %182 = sbr.rel (%p179) target = $region12
    $region11: #{tpu_custom_call.1} parent=5 // pred_region
      %s183 = ssub.s32 %s12, 1
      // Predicated region
      $region13: #{tpu_custom_call.1} parent=11 // pred_check
        %p184 = pneg %p59
      $region14: #{tpu_custom_call.1} parent=11 // pred_check_branch
        %186 = sbr.rel (%p184) target = $region16
      $region15: #{tpu_custom_call.1} parent=11 // pred_region
        _
      $region16: #{tpu_custom_call.1} parent=11 // pred_fallthru
        _
      // Predicated region
      $region17: #{tpu_custom_call.1} parent=11 // pred_check
        %p187 = pneg %p80
      $region18: #{tpu_custom_call.1} parent=11 // pred_check_branch
        %189 = sbr.rel (%p187) target = $region20
      $region19: #{tpu_custom_call.1} parent=11 // pred_region
        _
      $region20: #{tpu_custom_call.1} parent=11 // pred_fallthru
        _
      // Predicated region
      $region21: #{tpu_custom_call.1} parent=11 // pred_check
        %p190 = pneg %p101
      $region22: #{tpu_custom_call.1} parent=11 // pred_check_branch
        %192 = sbr.rel (%p190) target = $region24
      $region23: #{tpu_custom_call.1} parent=11 // pred_region
        _
      $region24: #{tpu_custom_call.1} parent=11 // pred_fallthru
        _
      // Predicated region
      $region25: #{tpu_custom_call.1} parent=11 // pred_check
        %p193 = pneg %p122
      $region26: #{tpu_custom_call.1} parent=11 // pred_check_branch
        %195 = sbr.rel (%p193) target = $region28
      $region27: #{tpu_custom_call.1} parent=11 // pred_region
        _
      $region28: #{tpu_custom_call.1} parent=11 // pred_fallthru
        _
      // Predicated region
      $region29: #{tpu_custom_call.1} parent=11 // pred_check
        %p196 = pneg %p143
      $region30: #{tpu_custom_call.1} parent=11 // pred_check_branch
        %198 = sbr.rel (%p196) target = $region32
      $region31: #{tpu_custom_call.1} parent=11 // pred_region
        _
      $region32: #{tpu_custom_call.1} parent=11 // pred_fallthru
        _
    $region12: #{tpu_custom_call.1} parent=5 // pred_fallthru
      _
    %p199 = scmp.lt.s32.totalorder %s12, 2
    // Predicated region
    $region33: #{tpu_custom_call.1} parent=5 // pred_check
      %p200 = pneg %p199
    $region34: #{tpu_custom_call.1} parent=5 // pred_check_branch
      %202 = sbr.rel (%p200) target = $region36
    $region35: #{tpu_custom_call.1} parent=5 // pred_region
      // Predicated region
      $region37: #{tpu_custom_call.1} parent=35 // pred_check
        %p203 = pneg %p32
      $region38: #{tpu_custom_call.1} parent=35 // pred_check_branch
        %205 = sbr.rel (%p203) target = $region40
      $region39: #{tpu_custom_call.1} parent=35 // pred_region
        %s206 = smul.u32 4, %s12
        %p207 = scmp.lt.s32.totalorder %s206, 7
        %s208 = scalar_select %p207, %s206, 7
        %s209 = smul.addr %s208, 8
        %s210 = scalar_lea.vmem %s0, %s209
        %s211 = smul.u32 4, %s12
      $region40: #{tpu_custom_call.1} parent=35 // pred_fallthru
        _
    $region36: #{tpu_custom_call.1} parent=5 // pred_fallthru
      _
    %p212 = scmp.le.s32.totalorder 1, %s12
    %p213 = scmp.lt.s32.totalorder %s12, 3
    %p214 = pnand %p212, %p213
    %p215 = pneg %p214
    // Predicated region
    $region41: #{tpu_custom_call.1} parent=5 // pred_check
      _
    $region42: #{tpu_custom_call.1} parent=5 // pred_check_branch
      %217 = sbr.rel (%p214) target = $region44
    $region43: #{tpu_custom_call.1} parent=5 // pred_region
      %s218 = ssub.s32 %s12, 1
      %s219 = smul.u32 4, %s17
      %p220 = scmp.lt.s32.totalorder %s219, 7
      %s221 = scalar_select %p220, %s219, 7
      %s222 = smul.addr %s221, 8
      %s223 = scalar_lea.vmem %s0, %s222
      %p224 = pneg %p38
      %p225 = pneg %p35
      %p226 = pneg %p59
      %p227 = pneg %p56
      %p228 = pneg %p80
      %p229 = pneg %p77
      %p230 = pneg %p101
      %p231 = pneg %p98
      %p232 = pneg %p122
      %p233 = pneg %p119
      %p234 = pneg %p143
      %p235 = pneg %p140
      %p236 = pneg %p169
      %p237 = pneg %p166
      %s238 = smul.u32 4, %s17
      %p239 = scmp.lt.s32.totalorder %s238, 7
      %s240 = scalar_select %p239, %s238, 7
      %s241 = smul.addr %s240, 8
      %s242 = scalar_lea.vmem %s6, %s241
      %s243 = smul.u32 4, %s17
      %p244 = scmp.lt.s32.totalorder %s243, 7
      %s245 = scalar_select %p244, %s243, 7
      %s246 = smul.addr %s245, 8
      %s247 = scalar_lea.vmem %s0, %s246
      %s248 = smul.u32 4, %s17
      %s249 = smul.u32 4, %s17
      %p250 = scmp.lt.s32.totalorder %s249, 7
      %s251 = scalar_select %p250, %s249, 7
      %s252 = smul.addr %s251, 8
      %s253 = scalar_lea.vmem %s6, %s252
      %s254 = smul.u32 4, %s17
      %v255 = vld [vmem:[%s247] sm:$0xff]
      %v256 = vld [vmem:[%s247 + $0x8] sm:$0xff]
      %v257 = vld [vmem:[%s247 + $0x10] sm:$0xff]
      %v258 = vld [vmem:[%s247 + $0x18] sm:$0xff]
      %v259 = vld [vmem:[%s1] sm:$0xff]
      %v260 = vld [vmem:[%s1 + $0x8] sm:$0xff]
      %v261 = vld [vmem:[%s1 + $0x10] sm:$0xff]
      %v262 = vld [vmem:[%s1 + $0x18] sm:$0xff]
      %v263 = vld [vmem:[%s1 + $0x20] sm:$0xff]
      %v264 = vld [vmem:[%s1 + $0x28] sm:$0xff]
      %v265 = vld [vmem:[%s1 + $0x30] sm:$0xff]
      %v266 = vld [vmem:[%s1 + $0x38] sm:$0xff]
      %v267 = vld [vmem:[%s1 + $0x40] sm:$0xff]
      %v268 = vld [vmem:[%s1 + $0x48] sm:$0xff]
      %v269 = vld [vmem:[%s1 + $0x50] sm:$0xff]
      %v270 = vld [vmem:[%s1 + $0x58] sm:$0xff]
      %v271 = vld [vmem:[%s1 + $0x60] sm:$0xff]
      %v272 = vld [vmem:[%s1 + $0x68] sm:$0xff]
      %v273 = vld [vmem:[%s1 + $0x70] sm:$0xff]
      %v274 = vld [vmem:[%s1 + $0x78] sm:$0xff]
      %v275 = vld [vmem:[%s2] sm:$0x1]
      %v277 = vlaneseq
      %v278 = vshrl.u32 %v277, 7
      %v279 = vsub.s32 0, %v278
      %v280 = vrot.slane %v275, %v279
      %282 = vmatprep.subr.mxu0 0.0
      %283 = vmatpush1.msra.mxu0 %v259
      %284 = vmatprep.subr.mxu0 0.0
      %285 = vmatpush1.msra.mxu0 %v260
      %286 = vmatprep.subr.mxu0 0.0
      %287 = vmatpush1.msra.mxu0 %v261
      %288 = vmatprep.subr.mxu0 0.0
      %289 = vmatpush1.msra.mxu0 %v262
      %290 = vmatprep.subr.mxu0 0.0
      %291 = vmatpush1.msra.mxu0 %v263
      %292 = vmatprep.subr.mxu0 0.0
      %293 = vmatpush1.msra.mxu0 %v264
      %294 = vmatprep.subr.mxu0 0.0
      %295 = vmatpush1.msra.mxu0 %v265
      %296 = vmatprep.subr.mxu0 0.0
      %297 = vmatpush1.msra.mxu0 %v266
      %298 = vmatprep.subr.mxu0 0.0
      %299 = vmatpush1.msra.mxu0 %v267
      %300 = vmatprep.subr.mxu0 0.0
      %301 = vmatpush1.msra.mxu0 %v268
      %302 = vmatprep.subr.mxu0 0.0
      %303 = vmatpush1.msra.mxu0 %v269
      %304 = vmatprep.subr.mxu0 0.0
      %305 = vmatpush1.msra.mxu0 %v270
      %306 = vmatprep.subr.mxu0 0.0
      %307 = vmatpush1.msra.mxu0 %v271
      %308 = vmatprep.subr.mxu0 0.0
      %309 = vmatpush1.msra.mxu0 %v272
      %310 = vmatprep.subr.mxu0 0.0
      %311 = vmatpush1.msra.mxu0 %v273
      %312 = vmatprep.subr.mxu0 0.0
      %313 = vmatpush1.msra.mxu0 %v274
      %314 = vmatprep.subr.mxu0 0.0
      %315 = vmatpush1.msra.mxu0 0.0
      %316 = vmatprep.subr.mxu0 0.0
      %317 = vmatpush1.msra.mxu0 0.0
      %318 = vmatprep.subr.mxu0 0.0
      %319 = vmatpush1.msra.mxu0 0.0
      %320 = vmatprep.subr.mxu0 0.0
      %321 = vmatpush1.msra.mxu0 0.0
      %322 = vmatprep.subr.mxu0 0.0
      %323 = vmatpush1.msra.mxu0 0.0
      %324 = vmatprep.subr.mxu0 0.0
      %325 = vmatpush1.msra.mxu0 0.0
      %326 = vmatprep.subr.mxu0 0.0
      %327 = vmatpush1.msra.mxu0 0.0
      %328 = vmatprep.subr.mxu0 0.0
      %329 = vmatpush1.msra.mxu0 0.0
      %330 = vmatprep.subr.mxu0 0.0
      %331 = vmatpush1.msra.mxu0 0.0
      %332 = vmatprep.subr.mxu0 0.0
      %333 = vmatpush1.msra.mxu0 0.0
      %334 = vmatprep.subr.mxu0 0.0
      %335 = vmatpush1.msra.mxu0 0.0
      %336 = vmatprep.subr.mxu0 0.0
      %337 = vmatpush1.msra.mxu0 0.0
      %338 = vmatprep.subr.mxu0 0.0
      %339 = vmatpush1.msra.mxu0 0.0
      %340 = vmatprep.subr.mxu0 0.0
      %341 = vmatpush1.msra.mxu0 0.0
      %342 = vmatprep.subr.mxu0 0.0
      %343 = vmatpush1.msra.mxu0 0.0
      %344 = vmatprep.subr.mxu0 0.0
      %345 = vmatpush1.msra.mxu0 0.0
      %346 = vmatprep.mubr.f32.mxu0 0.0
      %347 = vmatmul.mubr.f32.gmra.mrb[0].mxu0 %v255
      %v348 = vpop.f32.mrb[0].mxu0
      %v349 = vadd.f32 %v280, %v348
      %v350 = vpop.f32.mrb[0].mxu0
      %351 = vmatprep.mubr.f32.mxu0 0.0
      %352 = vmatmul.mubr.f32.gmra.mrb[0].mxu0 %v256
      %v353 = vpop.f32.mrb[0].mxu0
      %v354 = vadd.f32 %v280, %v353
      %v355 = vpop.f32.mrb[0].mxu0
      %356 = vmatprep.mubr.f32.mxu0 0.0
      %357 = vmatmul.mubr.f32.gmra.mrb[0].mxu0 %v257
      %v358 = vpop.f32.mrb[0].mxu0
      %v359 = vadd.f32 %v280, %v358
      %v360 = vpop.f32.mrb[0].mxu0
      %361 = vmatprep.mubr.f32.mxu0 0.0
      %362 = vmatmul.mubr.f32.gmra.mrb[0].mxu0 %v258
      %v363 = vpop.f32.mrb[0].mxu0
      %v364 = vadd.f32 %v280, %v363
      %v365 = vpop.f32.mrb[0].mxu0
      %366 = vdwg.mxu0
      %v367 = vtanh.pop %v349
      %v368 = vtanh.pop %v354
      %v369 = vtanh.pop %v359
      %v370 = vtanh.pop %v364
      %v371 = vld [vmem:[%s3] sm:$0xff]
      %v372 = vld [vmem:[%s3 + $0x8] sm:$0xff]
      %v373 = vld [vmem:[%s3 + $0x10] sm:$0xff]
      %v374 = vld [vmem:[%s3 + $0x18] sm:$0xff]
      %v375 = vld [vmem:[%s3 + $0x20] sm:$0xff]
      %v376 = vld [vmem:[%s3 + $0x28] sm:$0xff]
      %v377 = vld [vmem:[%s3 + $0x30] sm:$0xff]
      %v378 = vld [vmem:[%s3 + $0x38] sm:$0xff]
      %v379 = vld [vmem:[%s3 + $0x40] sm:$0xff]
      %v380 = vld [vmem:[%s3 + $0x48] sm:$0xff]
      %v381 = vld [vmem:[%s3 + $0x50] sm:$0xff]
      %v382 = vld [vmem:[%s3 + $0x58] sm:$0xff]
      %v383 = vld [vmem:[%s3 + $0x60] sm:$0xff]
      %v384 = vld [vmem:[%s3 + $0x68] sm:$0xff]
      %v385 = vld [vmem:[%s3 + $0x70] sm:$0xff]
      %v386 = vld [vmem:[%s3 + $0x78] sm:$0xff]
      %387 = vmatprep.subr.mxu0 0.0
      %388 = vmatpush1.msra.mxu0 %v371
      %389 = vmatprep.subr.mxu0 0.0
      %390 = vmatpush1.msra.mxu0 %v372
      %391 = vmatprep.subr.mxu0 0.0
      %392 = vmatpush1.msra.mxu0 %v373
      %393 = vmatprep.subr.mxu0 0.0
      %394 = vmatpush1.msra.mxu0 %v374
      %395 = vmatprep.subr.mxu0 0.0
      %396 = vmatpush1.msra.mxu0 %v375
      %397 = vmatprep.subr.mxu0 0.0
      %398 = vmatpush1.msra.mxu0 %v376
      %399 = vmatprep.subr.mxu0 0.0
      %400 = vmatpush1.msra.mxu0 %v377
      %401 = vmatprep.subr.mxu0 0.0
      %402 = vmatpush1.msra.mxu0 %v378
      %403 = vmatprep.subr.mxu0 0.0
      %404 = vmatpush1.msra.mxu0 %v379
      %405 = vmatprep.subr.mxu0 0.0
      %406 = vmatpush1.msra.mxu0 %v380
      %407 = vmatprep.subr.mxu0 0.0
      %408 = vmatpush1.msra.mxu0 %v381
      %409 = vmatprep.subr.mxu0 0.0
      %410 = vmatpush1.msra.mxu0 %v382
      %411 = vmatprep.subr.mxu0 0.0
      %412 = vmatpush1.msra.mxu0 %v383
      %413 = vmatprep.subr.mxu0 0.0
      %414 = vmatpush1.msra.mxu0 %v384
      %415 = vmatprep.subr.mxu0 0.0
      %416 = vmatpush1.msra.mxu0 %v385
      %417 = vmatprep.subr.mxu0 0.0
      %418 = vmatpush1.msra.mxu0 %v386
      %419 = vmatprep.subr.mxu0 0.0
      %420 = vmatpush1.msra.mxu0 0.0
      %421 = vmatprep.subr.mxu0 0.0
      %422 = vmatpush1.msra.mxu0 0.0
      %423 = vmatprep.subr.mxu0 0.0
      %424 = vmatpush1.msra.mxu0 0.0
      %425 = vmatprep.subr.mxu0 0.0
      %426 = vmatpush1.msra.mxu0 0.0
      %427 = vmatprep.subr.mxu0 0.0
      %428 = vmatpush1.msra.mxu0 0.0
      %429 = vmatprep.subr.mxu0 0.0
      %430 = vmatpush1.msra.mxu0 0.0
      %431 = vmatprep.subr.mxu0 0.0
      %432 = vmatpush1.msra.mxu0 0.0
      %433 = vmatprep.subr.mxu0 0.0
      %434 = vmatpush1.msra.mxu0 0.0
      %435 = vmatprep.subr.mxu0 0.0
      %436 = vmatpush1.msra.mxu0 0.0
      %437 = vmatprep.subr.mxu0 0.0
      %438 = vmatpush1.msra.mxu0 0.0
      %439 = vmatprep.subr.mxu0 0.0
      %440 = vmatpush1.msra.mxu0 0.0
      %441 = vmatprep.subr.mxu0 0.0
      %442 = vmatpush1.msra.mxu0 0.0
      %443 = vmatprep.subr.mxu0 0.0
      %444 = vmatpush1.msra.mxu0 0.0
      %445 = vmatprep.subr.mxu0 0.0
      %446 = vmatpush1.msra.mxu0 0.0
      %447 = vmatprep.subr.mxu0 0.0
      %448 = vmatpush1.msra.mxu0 0.0
      %449 = vmatprep.subr.mxu0 0.0
      %450 = vmatpush1.msra.mxu0 0.0
      %451 = vmatprep.mubr.f32.mxu0 0.0
      %452 = vmatmul.mubr.f32.gmra.mrb[0].mxu0 %v367
      %v453 = vpop.f32.mrb[0].mxu0
      %v454 = vadd.f32 0.0, %v453
      %v455 = vpop.f32.mrb[0].mxu0
      %456 = vmatprep.mubr.f32.mxu0 0.0
      %457 = vmatmul.mubr.f32.gmra.mrb[0].mxu0 %v368
      %v458 = vpop.f32.mrb[0].mxu0
      %v459 = vadd.f32 0.0, %v458
      %v460 = vpop.f32.mrb[0].mxu0
      %461 = vmatprep.mubr.f32.mxu0 0.0
      %462 = vmatmul.mubr.f32.gmra.mrb[0].mxu0 %v369
      %v463 = vpop.f32.mrb[0].mxu0
      %v464 = vadd.f32 0.0, %v463
      %v465 = vpop.f32.mrb[0].mxu0
      %466 = vmatprep.mubr.f32.mxu0 0.0
      %467 = vmatmul.mubr.f32.gmra.mrb[0].mxu0 %v370
      %v468 = vpop.f32.mrb[0].mxu0
      %v469 = vadd.f32 0.0, %v468
      %v470 = vpop.f32.mrb[0].mxu0
      %471 = vdwg.mxu0
      %vm472 = vcmask 31744
      %v473 = vsel %vm472, %v454, -inf
      %474 = vmax.xlane.f32.xlu0 %v473
      %v475 = vpop.xlane.xlu0 %474
      %v476 = vsel %vm472, %v459, -inf
      %477 = vmax.xlane.f32.xlu0 %v476
      %v478 = vpop.xlane.xlu0 %477
      %v479 = vsel %vm472, %v464, -inf
      %480 = vmax.xlane.f32.xlu0 %v479
      %v481 = vpop.xlane.xlu0 %480
      %v482 = vsel %vm472, %v469, -inf
      %483 = vmax.xlane.f32.xlu0 %v482
      %v484 = vpop.xlane.xlu0 %483
      %v485 = vsub.f32 %v454, %v475
      %v486 = vsub.f32 %v459, %v478
      %v487 = vsub.f32 %v464, %v481
      %v488 = vsub.f32 %v469, %v484
      %v489 = vmul.f32 %v485, 1.442695
      %v490 = vpow.pop %v489
      %v491 = vmul.f32 %v486, 1.442695
      %v492 = vpow.pop %v491
      %v493 = vmul.f32 %v487, 1.442695
      %v494 = vpow.pop %v493
      %v495 = vmul.f32 %v488, 1.442695
      %v496 = vpow.pop %v495
      %v497 = vsel %vm472, %v490, 0.0
      %498 = vadd.xlane.f32.xlu0 %v497
      %v499 = vpop.xlane.xlu0 %498
      %v500 = vsel %vm472, %v492, 0.0
      %501 = vadd.xlane.f32.xlu0 %v500
      %v502 = vpop.xlane.xlu0 %501
      %v503 = vsel %vm472, %v494, 0.0
      %504 = vadd.xlane.f32.xlu0 %v503
      %v505 = vpop.xlane.xlu0 %504
      %v506 = vsel %vm472, %v496, 0.0
      %507 = vadd.xlane.f32.xlu0 %v506
      %v508 = vpop.xlane.xlu0 %507
      %v509 = vrcp.pop %v499
      %v510 = vrcp.pop %v502
      %v511 = vrcp.pop %v505
      %v512 = vrcp.pop %v508
      %v513 = vmul.f32 %v499, %v509
      %v514 = vmul.f32 %v502, %v510
      %v515 = vmul.f32 %v505, %v511
      %v516 = vmul.f32 %v508, %v512
      %v517 = vsub.f32 2.0, %v513
      %v518 = vsub.f32 2.0, %v514
      %v519 = vsub.f32 2.0, %v515
      %v520 = vsub.f32 2.0, %v516
      %v521 = vmul.f32 %v509, %v517
      %v522 = vmul.f32 %v510, %v518
      %v523 = vmul.f32 %v511, %v519
      %v524 = vmul.f32 %v512, %v520
      %v525 = vmul.f32 %v490, %v521
      %v526 = vmul.f32 %v492, %v522
      %v527 = vmul.f32 %v494, %v523
      %v528 = vmul.f32 %v496, %v524
      %v529 = vld [vmem:[%s4] sm:$0xf]
      %v531 = vsel %vm472, %v525, 0
      %v534 = vsel %vm472, %v526, 0
      %v537 = vsel %vm472, %v527, 0
      %v540 = vsel %vm472, %v528, 0
      %vm542 = vcmask 1043456
      %v544 = vsel %vm542, %v529, 0
      %546 = vmatprep.subr.mxu0 0.0
      %547 = vmatpush1.msra.mxu0 %v544
      %548 = vmatprep.subr.mxu0 0.0
      %549 = vmatpush1.msra.mxu0 0.0
      %550 = vmatprep.subr.mxu0 0.0
      %551 = vmatpush1.msra.mxu0 0.0
      %552 = vmatprep.subr.mxu0 0.0
      %553 = vmatpush1.msra.mxu0 0.0
      %554 = vmatprep.subr.mxu0 0.0
      %555 = vmatpush1.msra.mxu0 0.0
      %556 = vmatprep.subr.mxu0 0.0
      %557 = vmatpush1.msra.mxu0 0.0
      %558 = vmatprep.subr.mxu0 0.0
      %559 = vmatpush1.msra.mxu0 0.0
      %560 = vmatprep.subr.mxu0 0.0
      %561 = vmatpush1.msra.mxu0 0.0
      %562 = vmatprep.subr.mxu0 0.0
      %563 = vmatpush1.msra.mxu0 0.0
      %564 = vmatprep.subr.mxu0 0.0
      %565 = vmatpush1.msra.mxu0 0.0
      %566 = vmatprep.subr.mxu0 0.0
      %567 = vmatpush1.msra.mxu0 0.0
      %568 = vmatprep.subr.mxu0 0.0
      %569 = vmatpush1.msra.mxu0 0.0
      %570 = vmatprep.subr.mxu0 0.0
      %571 = vmatpush1.msra.mxu0 0.0
      %572 = vmatprep.subr.mxu0 0.0
      %573 = vmatpush1.msra.mxu0 0.0
      %574 = vmatprep.subr.mxu0 0.0
      %575 = vmatpush1.msra.mxu0 0.0
      %576 = vmatprep.subr.mxu0 0.0
      %577 = vmatpush1.msra.mxu0 0.0
      %578 = vmatprep.subr.mxu0 0.0
      %579 = vmatpush1.msra.mxu0 0.0
      %580 = vmatprep.subr.mxu0 0.0
      %581 = vmatpush1.msra.mxu0 0.0
      %582 = vmatprep.subr.mxu0 0.0
      %583 = vmatpush1.msra.mxu0 0.0
      %584 = vmatprep.subr.mxu0 0.0
      %585 = vmatpush1.msra.mxu0 0.0
      %586 = vmatprep.subr.mxu0 0.0
      %587 = vmatpush1.msra.mxu0 0.0
      %588 = vmatprep.subr.mxu0 0.0
      %589 = vmatpush1.msra.mxu0 0.0
      %590 = vmatprep.subr.mxu0 0.0
      %591 = vmatpush1.msra.mxu0 0.0
      %592 = vmatprep.subr.mxu0 0.0
      %593 = vmatpush1.msra.mxu0 0.0
      %594 = vmatprep.subr.mxu0 0.0
      %595 = vmatpush1.msra.mxu0 0.0
      %596 = vmatprep.subr.mxu0 0.0
      %597 = vmatpush1.msra.mxu0 0.0
      %598 = vmatprep.subr.mxu0 0.0
      %599 = vmatpush1.msra.mxu0 0.0
      %600 = vmatprep.subr.mxu0 0.0
      %601 = vmatpush1.msra.mxu0 0.0
      %602 = vmatprep.subr.mxu0 0.0
      %603 = vmatpush1.msra.mxu0 0.0
      %604 = vmatprep.subr.mxu0 0.0
      %605 = vmatpush1.msra.mxu0 0.0
      %606 = vmatprep.subr.mxu0 0.0
      %607 = vmatpush1.msra.mxu0 0.0
      %608 = vmatprep.subr.mxu0 0.0
      %609 = vmatpush1.msra.mxu0 0.0
      %610 = vmatprep.mubr.f32.mxu0 0.0
      %611 = vmatmul.mubr.f32.gmra.mrb[0].mxu0 %v531
      %v612 = vpop.f32.mrb[0].mxu0
      %v613 = vadd.f32 0.0, %v612
      %v614 = vpop.f32.mrb[0].mxu0
      %615 = vmatprep.mubr.f32.mxu0 0.0
      %616 = vmatmul.mubr.f32.gmra.mrb[0].mxu0 %v534
      %v617 = vpop.f32.mrb[0].mxu0
      %v618 = vadd.f32 0.0, %v617
      %v619 = vpop.f32.mrb[0].mxu0
      %620 = vmatprep.mubr.f32.mxu0 0.0
      %621 = vmatmul.mubr.f32.gmra.mrb[0].mxu0 %v537
      %v622 = vpop.f32.mrb[0].mxu0
      %v623 = vadd.f32 0.0, %v622
      %v624 = vpop.f32.mrb[0].mxu0
      %625 = vmatprep.mubr.f32.mxu0 0.0
      %626 = vmatmul.mubr.f32.gmra.mrb[0].mxu0 %v540
      %v627 = vpop.f32.mrb[0].mxu0
      %v628 = vadd.f32 0.0, %v627
      %v629 = vpop.f32.mrb[0].mxu0
      %630 = vdwg.mxu0
      %v631 = vmul.f32 %v613, %v255
      %v632 = vmul.f32 %v618, %v256
      %v633 = vmul.f32 %v623, %v257
      %v634 = vmul.f32 %v628, %v258
      %v635 = vld [vmem:[%s5] sm:$0xff]
      %v636 = vld [vmem:[%s5 + $0x8] sm:$0xff]
      %v637 = vld [vmem:[%s5 + $0x10] sm:$0xff]
      %v638 = vld [vmem:[%s5 + $0x18] sm:$0xff]
      %v639 = vld [vmem:[%s5 + $0x20] sm:$0xff]
      %v640 = vld [vmem:[%s5 + $0x28] sm:$0xff]
      %v641 = vld [vmem:[%s5 + $0x30] sm:$0xff]
      %v642 = vld [vmem:[%s5 + $0x38] sm:$0xff]
      %v643 = vld [vmem:[%s5 + $0x40] sm:$0xff]
      %v644 = vld [vmem:[%s5 + $0x48] sm:$0xff]
      %v645 = vld [vmem:[%s5 + $0x50] sm:$0xff]
      %v646 = vld [vmem:[%s5 + $0x58] sm:$0xff]
      %v647 = vld [vmem:[%s5 + $0x60] sm:$0xff]
      %v648 = vld [vmem:[%s5 + $0x68] sm:$0xff]
      %v649 = vld [vmem:[%s5 + $0x70] sm:$0xff]
      %v650 = vld [vmem:[%s5 + $0x78] sm:$0xff]
      %651 = vmatprep.subr.mxu0 0.0
      %652 = vmatpush1.msra.mxu0 %v635
      %653 = vmatprep.subr.mxu0 0.0
      %654 = vmatpush1.msra.mxu0 %v636
      %655 = vmatprep.subr.mxu0 0.0
      %656 = vmatpush1.msra.mxu0 %v637
      %657 = vmatprep.subr.mxu0 0.0
      %658 = vmatpush1.msra.mxu0 %v638
      %659 = vmatprep.subr.mxu0 0.0
      %660 = vmatpush1.msra.mxu0 %v639
      %661 = vmatprep.subr.mxu0 0.0
      %662 = vmatpush1.msra.mxu0 %v640
      %663 = vmatprep.subr.mxu0 0.0
      %664 = vmatpush1.msra.mxu0 %v641
      %665 = vmatprep.subr.mxu0 0.0
      %666 = vmatpush1.msra.mxu0 %v642
      %667 = vmatprep.subr.mxu0 0.0
      %668 = vmatpush1.msra.mxu0 %v643
      %669 = vmatprep.subr.mxu0 0.0
      %670 = vmatpush1.msra.mxu0 %v644
      %671 = vmatprep.subr.mxu0 0.0
      %672 = vmatpush1.msra.mxu0 %v645
      %673 = vmatprep.subr.mxu0 0.0
      %674 = vmatpush1.msra.mxu0 %v646
      %675 = vmatprep.subr.mxu0 0.0
      %676 = vmatpush1.msra.mxu0 %v647
      %677 = vmatprep.subr.mxu0 0.0
      %678 = vmatpush1.msra.mxu0 %v648
      %679 = vmatprep.subr.mxu0 0.0
      %680 = vmatpush1.msra.mxu0 %v649
      %681 = vmatprep.subr.mxu0 0.0
      %682 = vmatpush1.msra.mxu0 %v650
      %683 = vmatprep.subr.mxu0 0.0
      %684 = vmatpush1.msra.mxu0 0.0
      %685 = vmatprep.subr.mxu0 0.0
      %686 = vmatpush1.msra.mxu0 0.0
      %687 = vmatprep.subr.mxu0 0.0
      %688 = vmatpush1.msra.mxu0 0.0
      %689 = vmatprep.subr.mxu0 0.0
      %690 = vmatpush1.msra.mxu0 0.0
      %691 = vmatprep.subr.mxu0 0.0
      %692 = vmatpush1.msra.mxu0 0.0
      %693 = vmatprep.subr.mxu0 0.0
      %694 = vmatpush1.msra.mxu0 0.0
      %695 = vmatprep.subr.mxu0 0.0
      %696 = vmatpush1.msra.mxu0 0.0
      %697 = vmatprep.subr.mxu0 0.0
      %698 = vmatpush1.msra.mxu0 0.0
      %699 = vmatprep.subr.mxu0 0.0
      %700 = vmatpush1.msra.mxu0 0.0
      %701 = vmatprep.subr.mxu0 0.0
      %702 = vmatpush1.msra.mxu0 0.0
      %703 = vmatprep.subr.mxu0 0.0
      %704 = vmatpush1.msra.mxu0 0.0
      %705 = vmatprep.subr.mxu0 0.0
      %706 = vmatpush1.msra.mxu0 0.0
      %707 = vmatprep.subr.mxu0 0.0
      %708 = vmatpush1.msra.mxu0 0.0
      %709 = vmatprep.subr.mxu0 0.0
      %710 = vmatpush1.msra.mxu0 0.0
      %711 = vmatprep.subr.mxu0 0.0
      %712 = vmatpush1.msra.mxu0 0.0
      %713 = vmatprep.subr.mxu0 0.0
      %714 = vmatpush1.msra.mxu0 0.0
      %715 = vmatprep.mubr.f32.mxu0 0.0
      %716 = vmatmul.mubr.f32.gmra.mrb[0].mxu0 %v631
      %v717 = vpop.f32.mrb[0].mxu0
      %v718 = vadd.f32 0.0, %v717
      %v719 = vpop.f32.mrb[0].mxu0
      %720 = vmatprep.mubr.f32.mxu0 0.0
      %721 = vmatmul.mubr.f32.gmra.mrb[0].mxu0 %v632
      %v722 = vpop.f32.mrb[0].mxu0
      %v723 = vadd.f32 0.0, %v722
      %v724 = vpop.f32.mrb[0].mxu0
      %725 = vmatprep.mubr.f32.mxu0 0.0
      %726 = vmatmul.mubr.f32.gmra.mrb[0].mxu0 %v633
      %v727 = vpop.f32.mrb[0].mxu0
      %v728 = vadd.f32 0.0, %v727
      %v729 = vpop.f32.mrb[0].mxu0
      %730 = vmatprep.mubr.f32.mxu0 0.0
      %731 = vmatmul.mubr.f32.gmra.mrb[0].mxu0 %v634
      %v732 = vpop.f32.mrb[0].mxu0
      %v733 = vadd.f32 0.0, %v732
      %v734 = vpop.f32.mrb[0].mxu0
      %735 = vdwg.mxu0
      %vm736 = vcmask 261120
      %737 = vst.msk [vmem:[%s253] sm:$0xff] %vm736, %v718
      %738 = vst.msk [vmem:[%s253 + $0x8] sm:$0xff] %vm736, %v723
      %739 = vst.msk [vmem:[%s253 + $0x10] sm:$0xff] %vm736, %v728
      %740 = vst.msk [vmem:[%s253 + $0x18] sm:$0xff] %vm736, %v733
      %s741 = smul.u32 4, %s17
      %p742 = scmp.lt.s32.totalorder %s741, 7
      %s743 = scalar_select %p742, %s741, 7
      %s744 = smul.addr %s743, 8
      %s745 = scalar_lea.vmem %s6, %s744
      // Predicated region
      $region45: #{tpu_custom_call.1} parent=43 // pred_check
        %p746 = pneg %p166
      $region46: #{tpu_custom_call.1} parent=43 // pred_check_branch
        %748 = sbr.rel (%p746) target = $region48
      $region47: #{tpu_custom_call.1} parent=43 // pred_region
        %s749 = smul.u32 4, %s17
      $region48: #{tpu_custom_call.1} parent=43 // pred_fallthru
        _
    $region44: #{tpu_custom_call.1} parent=5 // pred_fallthru
      _
    %p750 = scmp.le.s32.totalorder 2, %s12
    // Predicated region
    $region49: #{tpu_custom_call.1} parent=5 // pred_check
      %p751 = pneg %p750
    $region50: #{tpu_custom_call.1} parent=5 // pred_check_branch
      %753 = sbr.rel (%p751) target = $region52
    $region51: #{tpu_custom_call.1} parent=5 // pred_region
      %s754 = ssub.s32 %s12, 2
      // Predicated region
      $region53: #{tpu_custom_call.1} parent=51 // pred_check
        %p755 = pneg %p172
      $region54: #{tpu_custom_call.1} parent=51 // pred_check_branch
        %757 = sbr.rel (%p755) target = $region56
      $region55: #{tpu_custom_call.1} parent=51 // pred_region
        %s758 = smul.u32 4, %s18
        %p759 = scmp.lt.s32.totalorder %s758, 7
        %s760 = scalar_select %p759, %s758, 7
        %s761 = smul.addr %s760, 8
        %s762 = scalar_lea.vmem %s6, %s761
      $region56: #{tpu_custom_call.1} parent=51 // pred_fallthru
        _
    $region52: #{tpu_custom_call.1} parent=5 // pred_fallthru
      _
  $region6: #{tpu_custom_call.1} parent=0 // loop_footer
    %s16 = sadd.s32 1, %s12
  $region7: #{tpu_custom_call.1} parent=0 // loop_footer_branch
    %11 = sbr.rel target = $region3
  $region8: #{tpu_custom_call.1} parent=0 // loop_exit
    _

</llo_original>
